<compile_context>
chip_gen: v7x
topology: tpu7x:2x2x1
jax: 0.10.0
libtpu: 0.0.40
codegen_flags: <defaults>
</compile_context>

<pallas_src>
import math
import numpy as np

import jax
import jax.numpy as jnp
from jax import lax
from jax.experimental import pallas as pl
from jax.experimental.pallas import tpu as pltpu


# ----------------------------- Pallas kernels ------------------------------ #

def _probav_kernel(qs0_ref, k_ref, mask_ref, vsq_ref, out_ref):
    # qs0_ref: (1, H, F, P)  sampled query rows (QS0)
    # k_ref:   (1, H, N, P)  masked+scaled keys
    # mask_ref:(1, 1, N)     {0,1} mask, lane-dense
    # vsq_ref: (1, H, N)     sum_p v^2 per row, lane-dense
    # out_ref: (1, H, N)     prob_AV, lane-dense
    h_dim = k_ref.shape[1]
    mask_row = mask_ref[0]                                   # (1, N)
    vsq_all = vsq_ref[0]                                     # (H, N)

    rows = []
    for h in range(h_dim):                                   # H is small & static
        qh = qs0_ref[0, h].astype(jnp.bfloat16)              # (F, P)
        kh = k_ref[0, h].astype(jnp.bfloat16)                # (N, P)
        # Transposed ATS0: ATS0^T[f, n] = exp(QS0_f · k_n) * mask_n.
        # The rs0 column scale of the reference cancels exactly in Dinv*ATS0,
        # so it is omitted here (no effect on prob_AV).
        prod = lax.dot_general(qh, kh, (((1,), (1,)), ((), ())),
                               preferred_element_type=jnp.float32)   # (F, N)
        # NOTE: no max-subtraction before exp — matches the 'no_normalization'
        # ablation spec.  A fully-masked sketch column would make dinv inf.
        ats0 = jnp.exp(prod) * mask_row                                # (F, N)
        dinv = 1.0 / jnp.sum(ats0, axis=1, keepdims=True)              # (F, 1)
        ratio = ats0 * dinv                                            # (F, N)
        row_sq = jnp.sum(ratio * ratio, axis=0, keepdims=True)         # (1, N)
        prob = jnp.sqrt(row_sq * vsq_all[h:h + 1, :])                  # (1, N)
        rows.append(prob)
    out_ref[0] = jnp.concatenate(rows, axis=0)                         # (H, N)


def _skein_kernel(q_ref, k_ref, k1_ref, s1tv_ref, bias_ref, out_ref):
    # q_ref:    (1, H, N, P)      masked+scaled queries
    # k_ref:    (1, H, N, P)      masked+scaled keys
    # k1_ref:   (1, H, ACC*F, P)  gathered keys K1 (flattened over accumulation)
    # s1tv_ref: (1, H, ACC*F, P)  S1^T V tiled ACC times along rows
    # bias_ref: (1, 1, N)         -1e9 * (1 - mask), lane-dense
    # out_ref:  (1, H, N, P)
    h_dim = q_ref.shape[1]
    n = q_ref.shape[2]
    kv_t = min(n, 512)                       # static key-tile width
    n_tiles = (n + kv_t - 1) // kv_t
    bias = bias_ref[0]                       # (1, N)

    for h in range(h_dim):                   # H is small & static
        qh = q_ref[0, h].astype(jnp.bfloat16)                          # (N, P)

        # D[n] = sum_j exp(q_n·k_j + bias_j), accumulated over key tiles so the
        # full (N, N) logits never live in VMEM/vregs at once.
        d = jnp.zeros((n, 1), jnp.float32)
        for t in range(n_tiles):
            lo, hi = t * kv_t, min((t + 1) * kv_t, n)
            kt = k_ref[0, h, lo:hi, :].astype(jnp.bfloat16)            # (kv, P)
            bt = bias[:, lo:hi]                                        # (1, kv)
            logits = lax.dot_general(qh, kt, (((1,), (1,)), ((), ())),
                                     preferred_element_type=jnp.float32)
            d = d + jnp.sum(jnp.exp(logits + bt), axis=1, keepdims=True)

        # out = (exp(q @ K1^T) @ S1TV_rep) / D.  The sum over the accumulation
        # dim is folded into the contraction (S1TV tiled ACC times along rows),
        # so no sub-128-lane slice accumulation is needed.
        k1h = k1_ref[0, h].astype(jnp.bfloat16)                        # (AF, P)
        sh = s1tv_ref[0, h].astype(jnp.bfloat16)                       # (AF, P)
        e1 = jnp.exp(lax.dot_general(qh, k1h, (((1,), (1,)), ((), ())),
                                     preferred_element_type=jnp.float32))  # (N, AF)
        num = lax.dot_general(e1.astype(jnp.bfloat16), sh,
                              (((1,), (0,)), ((), ())),
                              preferred_element_type=jnp.float32)      # (N, P)
        out_ref[0, h] = (num / d).astype(out_ref.dtype)


# ------------------------------ pallas_call glue ---------------------------- #

def _prob_av_pallas(qs0, ks, mask_row, vsq):
    b, h, n, p = ks.shape
    f = qs0.shape[2]
    return pl.pallas_call(
        _probav_kernel,
        out_shape=jax.ShapeDtypeStruct((b, h, n), jnp.float32),
        grid_spec=pltpu.PrefetchScalarGridSpec(
            num_scalar_prefetch=0,
            grid=(b,),
            in_specs=[
                pl.BlockSpec((1, h, f, p), lambda i: (i, 0, 0, 0)),
                pl.BlockSpec((1, h, n, p), lambda i: (i, 0, 0, 0)),
                pl.BlockSpec((1, 1, n), lambda i: (i, 0, 0)),
                pl.BlockSpec((1, h, n), lambda i: (i, 0, 0)),
            ],
            out_specs=pl.BlockSpec((1, h, n), lambda i: (i, 0, 0)),
        ),
        compiler_params=pltpu.CompilerParams(
            dimension_semantics=("parallel",)),
    )(qs0, ks, mask_row, vsq)


def _skein_out_pallas(qs, ks, k1_flat, s1tv_rep, bias):
    b, h, n, p = qs.shape
    af = k1_flat.shape[2]
    return pl.pallas_call(
        _skein_kernel,
        out_shape=jax.ShapeDtypeStruct((b, h, n, p), qs.dtype),
        grid_spec=pltpu.PrefetchScalarGridSpec(
            num_scalar_prefetch=0,
            grid=(b,),
            in_specs=[
                pl.BlockSpec((1, h, n, p), lambda i: (i, 0, 0, 0)),
                pl.BlockSpec((1, h, n, p), lambda i: (i, 0, 0, 0)),
                pl.BlockSpec((1, h, af, p), lambda i: (i, 0, 0, 0)),
                pl.BlockSpec((1, h, af, p), lambda i: (i, 0, 0, 0)),
                pl.BlockSpec((1, 1, n), lambda i: (i, 0, 0)),
            ],
            out_specs=pl.BlockSpec((1, h, n, p), lambda i: (i, 0, 0, 0)),
        ),
        compiler_params=pltpu.CompilerParams(
            dimension_semantics=("parallel",)),
    )(qs, ks, k1_flat, s1tv_rep, bias)


# ------------------------------- full forward ------------------------------- #

def skein_attention_forward(q, k, v, mask, *, nb_features_cfg, accumulation, key):
    b, h, n, p = q.shape
    data_normalizer = p ** (-0.25)
    maskf = mask.astype(q.dtype)

    qs = q * maskf[:, None, :, None] * data_normalizer
    ks = k * maskf[:, None, :, None] * data_normalizer
    vs = v * maskf[:, None, :, None]

    non_padding = maskf.sum(-1)                                       # (B,)
    # NOTE: host-side int() mirrors torch's .item(); forces a sync and would
    # need a static value under jax.jit.
    nb_features = min(nb_features_cfg, int(non_padding.min()) - 1)

    # --- uniform sketching (matches torch semantics; JAX RNG) ---
    k0, k1key = jax.random.split(key)
    u = jax.random.uniform(k0, (1, nb_features), dtype=jnp.float32)
    s0 = (non_padding[:, None, None] * u[None]).astype(jnp.int32)     # (B,1,F)
    rs0 = jnp.broadcast_to(
        jnp.sqrt(non_padding / 1.0 / nb_features)[:, None, None],
        (b, 1, nb_features)).astype(jnp.float32)

    idx0 = jnp.broadcast_to(s0[:, 0][:, None, :, None], (b, h, nb_features, p))
    qs0 = jnp.take_along_axis(qs, idx0, axis=2)                       # QS0 (B,H,F,P)

    mask_row = maskf[:, None, :]                                      # (B,1,N) lane-dense
    vsq = jnp.sum(vs * vs, axis=-1)                                   # (B,H,N) lane-dense
    prob_av = _prob_av_pallas(qs0, ks, mask_row, vsq)                 # (B,H,N)

    # --- importance sketching: sample ACC*F indices w/o replacement ∝ prob_AV ---
    # TODO(synk): torch.multinomial RNG stream is not bit-reproducible; Gumbel
    # top-k gives the same sampling distribution (without replacement, ∝ weights).
    w = prob_av / prob_av.sum(-1, keepdims=True)
    g = jax.random.gumbel(k1key, (b, h, n), dtype=jnp.float32)
    scores = jnp.where(w > 0, jnp.log(w) + g, -jnp.inf)
    _, flat_idx = lax.top_k(scores, accumulation * nb_features)
    s1 = flat_idx.reshape(b, h, accumulation, nb_features)            # (B,H,ACC,F)
    # (rs1 from importance_sketching is never used by the torch forward)

    af = accumulation * nb_features
    idx1 = jnp.broadcast_to(s1.reshape(b, h, af)[..., None], (b, h, af, p))
    # TODO(synk): the K1 gather could move in-kernel via scalar-prefetched s1
    # indices (k is already VMEM-resident); kept in XLA since K1/S1TV are only
    # (ACC*F, P) per head.
    k1_flat = jnp.take_along_axis(ks, idx1, axis=2)                   # (B,H,ACC*F,P)
    s1tv = jnp.take_along_axis(vs, idx1, axis=2).reshape(
        b, h, accumulation, nb_features, p).sum(2)                    # (B,H,F,P)
    s1tv_rep = jnp.tile(s1tv, (1, 1, accumulation, 1))                # (B,H,ACC*F,P)

    bias = (-1e9 * (1.0 - maskf))[:, None, :]                         # (B,1,N)

    out = _skein_out_pallas(qs, ks, k1_flat, s1tv_rep, bias)          # (B,H,N,P)
    aux = dict(qs=qs, ks=ks, vs=vs, maskf=maskf, s0=s0, rs0=rs0, s1=s1,
               prob_av=prob_av)
    return out, aux


# --------------------------- pure-JAX reference ----------------------------- #

def reference_from_samples(qs, ks, vs, maskf, s0, rs0, s1):
    b, h, n, p = qs.shape
    f = s0.shape[-1]
    acc = s1.shape[-2]

    idx0 = jnp.broadcast_to(s0[:, 0][:, None, :, None], (b, h, f, p))
    qs0 = jnp.take_along_axis(qs, idx0, axis=2)
    ats0 = jnp.exp(jnp.einsum('bhnp,bhdp->bhnd', ks, qs0)) * rs0[:, 0][:, None, None, :]
    ats0 = ats0 * maskf[:, None, :, None]
    dinvp = 1.0 / ats0.sum(2)
    dinv_s0ta = jnp.einsum('bhd,bhnd->bhdn', dinvp, ats0)
    prob_av = jnp.sqrt((dinv_s0ta ** 2).sum(2) * (vs ** 2).sum(-1))

    flat = s1.reshape(b, h, acc * f)
    idx1 = jnp.broadcast_to(flat[..., None], (b, h, acc * f, p))
    k1 = jnp.take_along_axis(ks, idx1, 2).reshape(b, h, acc, f, p)
    s1tv = jnp.take_along_axis(vs, idx1, 2).reshape(b, h, acc, f, p).sum(2)
    qk1 = jnp.einsum('bhnp,bhmdp->bhnmd', qs, k1)
    as1 = jnp.exp(qk1).sum(-2)
    dot = jnp.einsum('bhnp,bhmp->bhnm', qs, ks) - 1e9 * (1.0 - maskf)[:, None, None, :]
    d = jnp.exp(dot).sum(-1)
    out = jnp.einsum('bhn,bhnd,bhdp->bhnp', 1.0 / d, as1, s1tv)
    return prob_av, out


# ----------------------------------- main ----------------------------------- #

if __name__ == "__main__":
    b, h, n, p = 2, 2, 64, 16          # batch, heads, max_seq_len, head_dim
    accumulation = 2
    sampling_factor = 2.0
    nb_features_cfg = int(sampling_factor * math.log(n))   # config default

    key = jax.random.PRNGKey(0)
    kq, kk, kv, ksamp = jax.random.split(key, 4)
    q = jax.random.normal(kq, (b, h, n, p), dtype=jnp.float32)
    k = jax.random.normal(kk, (b, h, n, p), dtype=jnp.float32)
    v = jax.random.normal(kv, (b, h, n, p), dtype=jnp.float32)

    mask = jnp.ones((b, n), dtype=jnp.float32)
    mask = mask.at[1, 48:].set(0.0)     # second batch has padding

    out, aux = skein_attention_forward(
        q, k, v, mask,
        nb_features_cfg=nb_features_cfg,
        accumulation=accumulation,
        key=ksamp)
    out = jax.block_until_ready(out)

    prob_ref, out_ref = reference_from_samples(
        aux['qs'], aux['ks'], aux['vs'], aux['maskf'],
        aux['s0'], aux['rs0'], aux['s1'])

    # bf16 MXU operands in the kernels (vs f32 reference einsums) need a
    # slightly looser tolerance than exact f32.
    np.testing.assert_allclose(np.asarray(aux['prob_av']), np.asarray(prob_ref),
                               rtol=5e-2, atol=5e-3)
    np.testing.assert_allclose(np.asarray(out), np.asarray(out_ref),
                               rtol=5e-2, atol=5e-3)
    print("KERNEL_OK")
</pallas_src>

<mosaic_0001>
module attributes {stable_mosaic.version = 11 : i64} {
  func.func @_probav_kernel(%arg0: i32, %arg1: memref<1x2x8x16xf32, #tpu.memory_space<vmem>>, %arg2: memref<1x2x64x16xf32, #tpu.memory_space<vmem>>, %arg3: memref<1x1x64xf32, #tpu.memory_space<vmem>>, %arg4: memref<1x2x64xf32, #tpu.memory_space<vmem>>, %arg5: memref<1x2x64xf32, #tpu.memory_space<vmem>>) attributes {dimension_semantics = [#tpu.dimension_semantics<parallel>], iteration_bounds = array<i64: 2>, scalar_prefetch = 0 : i64, scratch_operands = 0 : i64, tpu.core_type = #tpu.core_type<tc>, window_params = [{transform_indices = @transform_0, window_bounds = array<i64: 1, 2, 8, 16>}, {transform_indices = @transform_1, window_bounds = array<i64: 1, 2, 64, 16>}, {transform_indices = @transform_2, window_bounds = array<i64: 1, 1, 64>}, {transform_indices = @transform_3, window_bounds = array<i64: 1, 2, 64>}, {transform_indices = @transform_4, window_bounds = array<i64: 1, 2, 64>}]} {
    %c0 = arith.constant 0 : index
    %c0_0 = arith.constant 0 : index
    %c0_1 = arith.constant 0 : index
    %0 = vector.load %arg3[%c0, %c0_0, %c0_1] : memref<1x1x64xf32, #tpu.memory_space<vmem>>, vector<1x1x64xf32>
    %1 = vector.shape_cast %0 : vector<1x1x64xf32> to vector<1x64xf32>
    %c0_2 = arith.constant 0 : index
    %c0_3 = arith.constant 0 : index
    %c0_4 = arith.constant 0 : index
    %2 = vector.load %arg4[%c0_2, %c0_3, %c0_4] : memref<1x2x64xf32, #tpu.memory_space<vmem>>, vector<1x2x64xf32>
    %3 = vector.shape_cast %2 : vector<1x2x64xf32> to vector<2x64xf32>
    %c0_5 = arith.constant 0 : index
    %c0_6 = arith.constant 0 : index
    %c0_7 = arith.constant 0 : index
    %c0_8 = arith.constant 0 : index
    %4 = vector.load %arg1[%c0_5, %c0_6, %c0_7, %c0_8] : memref<1x2x8x16xf32, #tpu.memory_space<vmem>>, vector<1x1x8x16xf32>
    %5 = vector.shape_cast %4 : vector<1x1x8x16xf32> to vector<8x16xf32>
    %6 = arith.truncf %5 : vector<8x16xf32> to vector<8x16xbf16>
    %c0_9 = arith.constant 0 : index
    %c0_10 = arith.constant 0 : index
    %c0_11 = arith.constant 0 : index
    %c0_12 = arith.constant 0 : index
    %7 = vector.load %arg2[%c0_9, %c0_10, %c0_11, %c0_12] : memref<1x2x64x16xf32, #tpu.memory_space<vmem>>, vector<1x1x64x16xf32>
    %8 = vector.shape_cast %7 : vector<1x1x64x16xf32> to vector<64x16xf32>
    %9 = arith.truncf %8 : vector<64x16xf32> to vector<64x16xbf16>
    %cst = arith.constant dense<0.000000e+00> : vector<8x64xf32>
    %10 = tpu.matmul %6, %9, %cst {dimension_numbers = #tpu.dot_dimension_numbers<[1], [1], [0], [0], [0, 0, 1, 0], [], []>} : vector<8x16xbf16>, vector<64x16xbf16>, vector<8x64xf32> -> vector<8x64xf32>
    %11 = math.exp %10 : vector<8x64xf32>
    %12 = vector.broadcast %1 : vector<1x64xf32> to vector<8x64xf32>
    %13 = arith.mulf %11, %12 : vector<8x64xf32>
    %cst_13 = arith.constant dense<0.000000e+00> : vector<8xf32>
    %14 = vector.multi_reduction <add>, %13, %cst_13 [1] : vector<8x64xf32> to vector<8xf32>
    %15 = vector.shape_cast %14 : vector<8xf32> to vector<8x1xf32>
    %cst_14 = arith.constant 1.000000e+00 : f32
    %16 = vector.broadcast %cst_14 : f32 to vector<8x1xf32>
    %17 = arith.divf %16, %15 : vector<8x1xf32>
    %18 = vector.broadcast %17 : vector<8x1xf32> to vector<8x64xf32>
    %19 = arith.mulf %13, %18 : vector<8x64xf32>
    %20 = arith.mulf %19, %19 : vector<8x64xf32>
    %cst_15 = arith.constant dense<0.000000e+00> : vector<64xf32>
    %21 = vector.multi_reduction <add>, %20, %cst_15 [0] : vector<8x64xf32> to vector<64xf32>
    %22 = vector.shape_cast %21 : vector<64xf32> to vector<1x64xf32>
    %23 = vector.extract_strided_slice %3 {offsets = [0, 0], sizes = [1, 64], strides = [1, 1]} : vector<2x64xf32> to vector<1x64xf32>
    %24 = arith.mulf %22, %23 : vector<1x64xf32>
    %25 = math.sqrt %24 : vector<1x64xf32>
    %c0_16 = arith.constant 0 : index
    %c1 = arith.constant 1 : index
    %c0_17 = arith.constant 0 : index
    %c0_18 = arith.constant 0 : index
    %26 = vector.load %arg1[%c0_16, %c1, %c0_17, %c0_18] : memref<1x2x8x16xf32, #tpu.memory_space<vmem>>, vector<1x1x8x16xf32>
    %27 = vector.shape_cast %26 : vector<1x1x8x16xf32> to vector<8x16xf32>
    %28 = arith.truncf %27 : vector<8x16xf32> to vector<8x16xbf16>
    %c0_19 = arith.constant 0 : index
    %c1_20 = arith.constant 1 : index
    %c0_21 = arith.constant 0 : index
    %c0_22 = arith.constant 0 : index
    %29 = vector.load %arg2[%c0_19, %c1_20, %c0_21, %c0_22] : memref<1x2x64x16xf32, #tpu.memory_space<vmem>>, vector<1x1x64x16xf32>
    %30 = vector.shape_cast %29 : vector<1x1x64x16xf32> to vector<64x16xf32>
    %31 = arith.truncf %30 : vector<64x16xf32> to vector<64x16xbf16>
    %cst_23 = arith.constant dense<0.000000e+00> : vector<8x64xf32>
    %32 = tpu.matmul %28, %31, %cst_23 {dimension_numbers = #tpu.dot_dimension_numbers<[1], [1], [0], [0], [0, 0, 1, 0], [], []>} : vector<8x16xbf16>, vector<64x16xbf16>, vector<8x64xf32> -> vector<8x64xf32>
    %33 = math.exp %32 : vector<8x64xf32>
    %34 = vector.broadcast %1 : vector<1x64xf32> to vector<8x64xf32>
    %35 = arith.mulf %33, %34 : vector<8x64xf32>
    %cst_24 = arith.constant dense<0.000000e+00> : vector<8xf32>
    %36 = vector.multi_reduction <add>, %35, %cst_24 [1] : vector<8x64xf32> to vector<8xf32>
    %37 = vector.shape_cast %36 : vector<8xf32> to vector<8x1xf32>
    %cst_25 = arith.constant 1.000000e+00 : f32
    %38 = vector.broadcast %cst_25 : f32 to vector<8x1xf32>
    %39 = arith.divf %38, %37 : vector<8x1xf32>
    %40 = vector.broadcast %39 : vector<8x1xf32> to vector<8x64xf32>
    %41 = arith.mulf %35, %40 : vector<8x64xf32>
    %42 = arith.mulf %41, %41 : vector<8x64xf32>
    %cst_26 = arith.constant dense<0.000000e+00> : vector<64xf32>
    %43 = vector.multi_reduction <add>, %42, %cst_26 [0] : vector<8x64xf32> to vector<64xf32>
    %44 = vector.shape_cast %43 : vector<64xf32> to vector<1x64xf32>
    %45 = vector.extract_strided_slice %3 {offsets = [1, 0], sizes = [1, 64], strides = [1, 1]} : vector<2x64xf32> to vector<1x64xf32>
    %46 = arith.mulf %44, %45 : vector<1x64xf32>
    %47 = math.sqrt %46 : vector<1x64xf32>
    %48 = tpu.concatenate %25, %47 in 0 : vector<1x64xf32>, vector<1x64xf32> -> vector<2x64xf32>
    %c0_27 = arith.constant 0 : index
    %c0_28 = arith.constant 0 : index
    %c0_29 = arith.constant 0 : index
    %49 = vector.load %arg5[%c0_27, %c0_28, %c0_29] : memref<1x2x64xf32, #tpu.memory_space<vmem>>, vector<1x2x64xf32>
    %50 = vector.shape_cast %49 : vector<1x2x64xf32> to vector<2x64xf32>
    %51 = vector.shape_cast %48 : vector<2x64xf32> to vector<1x2x64xf32>
    tpu.vector_store %arg5[%c0_27, %c0_28, %c0_29], %51 {strides = array<i32>} : memref<1x2x64xf32, #tpu.memory_space<vmem>>, vector<1x2x64xf32>,
    return
  }
  func.func @transform_0(%arg0: i32) -> (i32, i32, i32, i32) {
    %c0_i32 = arith.constant 0 : i32
    %c0_i32_0 = arith.constant 0 : i32
    %c0_i32_1 = arith.constant 0 : i32
    %c0_i32_2 = arith.constant 0 : i32
    return %arg0, %c0_i32, %c0_i32_0, %c0_i32_1 : i32, i32, i32, i32
  }
  func.func @transform_1(%arg0: i32) -> (i32, i32, i32, i32) {
    %c0_i32 = arith.constant 0 : i32
    %c0_i32_0 = arith.constant 0 : i32
    %c0_i32_1 = arith.constant 0 : i32
    %c0_i32_2 = arith.constant 0 : i32
    return %arg0, %c0_i32, %c0_i32_0, %c0_i32_1 : i32, i32, i32, i32
  }
  func.func @transform_2(%arg0: i32) -> (i32, i32, i32) {
    %c0_i32 = arith.constant 0 : i32
    %c0_i32_0 = arith.constant 0 : i32
    %c0_i32_1 = arith.constant 0 : i32
    return %arg0, %c0_i32, %c0_i32_0 : i32, i32, i32
  }
  func.func @transform_3(%arg0: i32) -> (i32, i32, i32) {
    %c0_i32 = arith.constant 0 : i32
    %c0_i32_0 = arith.constant 0 : i32
    %c0_i32_1 = arith.constant 0 : i32
    return %arg0, %c0_i32, %c0_i32_0 : i32, i32, i32
  }
  func.func @transform_4(%arg0: i32) -> (i32, i32, i32) {
    %c0_i32 = arith.constant 0 : i32
    %c0_i32_0 = arith.constant 0 : i32
    %c0_i32_1 = arith.constant 0 : i32
    return %arg0, %c0_i32, %c0_i32_0 : i32, i32, i32
  }
}

</mosaic_0001>

<llo_original>
// kernel: tpu_custom_call.1
$region0: #{tpu_custom_call.1}
  #allocation0 [shape = 'u32[]', space=smem, size = 0x4, offset = 0x4, fixed_abs, tag = 'smem constant byte address 0x4 - core index']
  #allocation1 [shape = 'u32[144,128]{1,0:T(1,128)}', space=vmem, size = 0x12000, scoped, tag = 'internal scratch']
  %s0 = inlined_call_operand.vmem [shape: f32[2,2,8,16], index: 0, kind: input, shape index: {}]
  %s1 = inlined_call_operand.vmem [shape: f32[2,2,64,16], index: 1, kind: input, shape index: {}]
  %s2 = inlined_call_operand.vmem [shape: f32[2,1,64], index: 2, kind: input, shape index: {}]
  %s3 = inlined_call_operand.vmem [shape: f32[2,2,64], index: 3, kind: input, shape index: {}]
  %s4 = inlined_call_operand.hbm [shape: f32[2,2,64], index: 4, kind: output, shape index: {}]
  %s5 = sld [smem:[#allocation0]]
  $region49: #{tpu_custom_call.1} parent=0
    _
  %s7 = ssub.s32 1, %s5
  %s8 = scalar_select 0, %s7, %s5
  $region1: #{tpu_custom_call.1} parent=0
    #allocation2 [shape = 'u8[2048]{0}', space=vmem, size = 0x800, scoped, tag = 'output window, operand 0']
    #allocation3 [shape = 's32[2]{0}', space=sflag, size = 0x8, scoped, tag = 'scoped memory for tpu_custom_call.1']
    %9 = vsyncpa [#allocation3], 0
    %s10 = scalar_lea.sflag [#allocation3], 1
    %11 = vsyncpa %s10, 0
    loop: start=0, step=1, limit=4
    $region2: #{tpu_custom_call.1} parent=1 // loop_pre_header
      _
    $region3: #{tpu_custom_call.1} parent=1 // loop_header
      %s13 = sphi 0, %s17
      %p14 = scmp.ge.s32.totalorder %s13, 4
      %s23 = sphi 0, %s25
      %s26 = sphi 0, %s23
      %s27 = sphi 0, %s26
      %s43 = sphi 0, %s27
      %s49 = sphi 0, %s51
      %s52 = sphi 0, %s49
      %s53 = sphi 0, %s52
      %s69 = sphi 0, %s53
      %s75 = sphi 0, %s77
      %s78 = sphi 0, %s75
      %s79 = sphi 0, %s78
      %s95 = sphi 0, %s79
      %s101 = sphi 0, %s103
      %s104 = sphi 0, %s101
      %s105 = sphi 0, %s104
      %s121 = sphi 0, %s105
      %s127 = sphi 0, %s129
      %s130 = sphi 0, %s127
      %s131 = sphi 0, %s130
      %s147 = sphi 0, %s131
    $region4: #{tpu_custom_call.1} parent=1 // loop_header_branch
      %16 = sbr.rel (%p14) target = $region8
    $region5: #{tpu_custom_call.1} parent=1 // loop_body
      %s18 = ssub.s32 %s13, 1
      %s19 = ssub.s32 %s13, 2
      %s20 = sadd.s32 %s13, 1
      %s21 = ssub.s32 %s13, %s20
      %p22 = scmp.eq.s32.totalorder %s21, 0
      %s24 = sadd.s32 %s23, 1
      %s25 = scalar_select %p22, %s23, %s24
      %p28 = pneg %p22
      %p29 = scmp.eq.s32.totalorder %s13, 1
      %p30 = por %p28, %p29
      %p31 = scmp.ne.s32.totalorder %s23, %s26
      %p32 = scmp.eq.s32.totalorder %s13, 0
      %p33 = por %p31, %p32
      %p34 = scmp.ne.s32.totalorder %s23, %s26
      %p35 = scmp.eq.s32.totalorder %s18, 1
      %p36 = por %p34, %p35
      %p37 = scmp.ne.s32.totalorder %s26, %s27
      %p38 = scmp.eq.s32.totalorder %s18, 0
      %p39 = por %p37, %p38
      %p40 = scmp.ne.s32.totalorder %s26, %s27
      %p41 = scmp.eq.s32.totalorder %s19, 1
      %p42 = por %p40, %p41
      %p44 = scmp.ne.s32.totalorder %s27, %s43
      %p45 = scmp.eq.s32.totalorder %s19, 0
      %p46 = por %p44, %p45
      %s47 = ssub.s32 %s13, %s20
      %p48 = scmp.eq.s32.totalorder %s47, 0
      %s50 = sadd.s32 %s49, 1
      %s51 = scalar_select %p48, %s49, %s50
      %p54 = pneg %p48
      %p55 = scmp.eq.s32.totalorder %s13, 1
      %p56 = por %p54, %p55
      %p57 = scmp.ne.s32.totalorder %s49, %s52
      %p58 = scmp.eq.s32.totalorder %s13, 0
      %p59 = por %p57, %p58
      %p60 = scmp.ne.s32.totalorder %s49, %s52
      %p61 = scmp.eq.s32.totalorder %s18, 1
      %p62 = por %p60, %p61
      %p63 = scmp.ne.s32.totalorder %s52, %s53
      %p64 = scmp.eq.s32.totalorder %s18, 0
      %p65 = por %p63, %p64
      %p66 = scmp.ne.s32.totalorder %s52, %s53
      %p67 = scmp.eq.s32.totalorder %s19, 1
      %p68 = por %p66, %p67
      %p70 = scmp.ne.s32.totalorder %s53, %s69
      %p71 = scmp.eq.s32.totalorder %s19, 0
      %p72 = por %p70, %p71
      %s73 = ssub.s32 %s13, %s20
      %p74 = scmp.eq.s32.totalorder %s73, 0
      %s76 = sadd.s32 %s75, 1
      %s77 = scalar_select %p74, %s75, %s76
      %p80 = pneg %p74
      %p81 = scmp.eq.s32.totalorder %s13, 1
      %p82 = por %p80, %p81
      %p83 = scmp.ne.s32.totalorder %s75, %s78
      %p84 = scmp.eq.s32.totalorder %s13, 0
      %p85 = por %p83, %p84
      %p86 = scmp.ne.s32.totalorder %s75, %s78
      %p87 = scmp.eq.s32.totalorder %s18, 1
      %p88 = por %p86, %p87
      %p89 = scmp.ne.s32.totalorder %s78, %s79
      %p90 = scmp.eq.s32.totalorder %s18, 0
      %p91 = por %p89, %p90
      %p92 = scmp.ne.s32.totalorder %s78, %s79
      %p93 = scmp.eq.s32.totalorder %s19, 1
      %p94 = por %p92, %p93
      %p96 = scmp.ne.s32.totalorder %s79, %s95
      %p97 = scmp.eq.s32.totalorder %s19, 0
      %p98 = por %p96, %p97
      %s99 = ssub.s32 %s13, %s20
      %p100 = scmp.eq.s32.totalorder %s99, 0
      %s102 = sadd.s32 %s101, 1
      %s103 = scalar_select %p100, %s101, %s102
      %p106 = pneg %p100
      %p107 = scmp.eq.s32.totalorder %s13, 1
      %p108 = por %p106, %p107
      %p109 = scmp.ne.s32.totalorder %s101, %s104
      %p110 = scmp.eq.s32.totalorder %s13, 0
      %p111 = por %p109, %p110
      %p112 = scmp.ne.s32.totalorder %s101, %s104
      %p113 = scmp.eq.s32.totalorder %s18, 1
      %p114 = por %p112, %p113
      %p115 = scmp.ne.s32.totalorder %s104, %s105
      %p116 = scmp.eq.s32.totalorder %s18, 0
      %p117 = por %p115, %p116
      %p118 = scmp.ne.s32.totalorder %s104, %s105
      %p119 = scmp.eq.s32.totalorder %s19, 1
      %p120 = por %p118, %p119
      %p122 = scmp.ne.s32.totalorder %s105, %s121
      %p123 = scmp.eq.s32.totalorder %s19, 0
      %p124 = por %p122, %p123
      %s125 = ssub.s32 %s13, %s20
      %p126 = scmp.eq.s32.totalorder %s125, 0
      %s128 = sadd.s32 %s127, 1
      %s129 = scalar_select %p126, %s127, %s128
      %p132 = pneg %p126
      %p133 = scmp.eq.s32.totalorder %s13, 1
      %p134 = por %p132, %p133
      %p135 = scmp.ne.s32.totalorder %s127, %s130
      %p136 = scmp.eq.s32.totalorder %s13, 0
      %p137 = por %p135, %p136
      %p138 = scmp.ne.s32.totalorder %s127, %s130
      %p139 = scmp.eq.s32.totalorder %s18, 1
      %p140 = por %p138, %p139
      %p141 = scmp.ne.s32.totalorder %s130, %s131
      %p142 = scmp.eq.s32.totalorder %s18, 0
      %p143 = por %p141, %p142
      %p144 = scmp.ne.s32.totalorder %s130, %s131
      %p145 = scmp.eq.s32.totalorder %s19, 1
      %p146 = por %p144, %p145
      %p148 = scmp.ne.s32.totalorder %s131, %s147
      %p149 = scmp.eq.s32.totalorder %s19, 0
      %p150 = por %p148, %p149
      %p151 = scmp.le.s32.totalorder 1, %s13
      %p152 = scmp.lt.s32.totalorder %s13, 3
      %p153 = pnand %p151, %p152
      %p154 = pneg %p153
      // Predicated region
      $region9: #{tpu_custom_call.1} parent=5 // pred_check
        _
      $region10: #{tpu_custom_call.1} parent=5 // pred_check_branch
        %156 = sbr.rel (%p153) target = $region12
      $region11: #{tpu_custom_call.1} parent=5 // pred_region
        %s157 = ssub.s32 %s13, 1
      $region12: #{tpu_custom_call.1} parent=5 // pred_fallthru
        _
      %p158 = scmp.lt.s32.totalorder %s13, 2
      // Predicated region
      $region13: #{tpu_custom_call.1} parent=5 // pred_check
        %p159 = pneg %p158
      $region14: #{tpu_custom_call.1} parent=5 // pred_check_branch
        %161 = sbr.rel (%p159) target = $region16
      $region15: #{tpu_custom_call.1} parent=5 // pred_region
        // Predicated region
        $region17: #{tpu_custom_call.1} parent=15 // pred_check
          %p162 = pneg %p33
        $region18: #{tpu_custom_call.1} parent=15 // pred_check_branch
          %164 = sbr.rel (%p162) target = $region20
        $region19: #{tpu_custom_call.1} parent=15 // pred_region
          %p165 = scmp.lt.s32.totalorder %s13, 1
          %s166 = scalar_select %p165, %s13, 1
          %s167 = smul.addr %s166, 2
          %s168 = smul.addr %s167, 8
          %s169 = scalar_lea.vmem %s0, %s168
        $region20: #{tpu_custom_call.1} parent=15 // pred_fallthru
          _
        // Predicated region
        $region21: #{tpu_custom_call.1} parent=15 // pred_check
          %p170 = pneg %p59
        $region22: #{tpu_custom_call.1} parent=15 // pred_check_branch
          %172 = sbr.rel (%p170) target = $region24
        $region23: #{tpu_custom_call.1} parent=15 // pred_region
          %p173 = scmp.lt.s32.totalorder %s13, 1
          %s174 = scalar_select %p173, %s13, 1
          %s175 = smul.addr %s174, 16
          %s176 = smul.addr %s175, 8
          %s177 = scalar_lea.vmem %s1, %s176
        $region24: #{tpu_custom_call.1} parent=15 // pred_fallthru
          _
        // Predicated region
        $region25: #{tpu_custom_call.1} parent=15 // pred_check
          %p178 = pneg %p85
        $region26: #{tpu_custom_call.1} parent=15 // pred_check_branch
          %180 = sbr.rel (%p178) target = $region28
        $region27: #{tpu_custom_call.1} parent=15 // pred_region
          %p181 = scmp.lt.s32.totalorder %s13, 1
          %s182 = scalar_select %p181, %s13, 1
          %s183 = scalar_lea.vmem %s2, %s182
        $region28: #{tpu_custom_call.1} parent=15 // pred_fallthru
          _
        // Predicated region
        $region29: #{tpu_custom_call.1} parent=15 // pred_check
          %p184 = pneg %p111
        $region30: #{tpu_custom_call.1} parent=15 // pred_check_branch
          %186 = sbr.rel (%p184) target = $region32
        $region31: #{tpu_custom_call.1} parent=15 // pred_region
          %p187 = scmp.lt.s32.totalorder %s13, 1
          %s188 = scalar_select %p187, %s13, 1
          %s189 = smul.addr %s188, 2
          %s190 = scalar_lea.vmem %s3, %s189
        $region32: #{tpu_custom_call.1} parent=15 // pred_fallthru
          _
      $region16: #{tpu_custom_call.1} parent=5 // pred_fallthru
        _
      %p191 = scmp.le.s32.totalorder 1, %s13
      %p192 = scmp.lt.s32.totalorder %s13, 3
      %p193 = pnand %p191, %p192
      %p194 = pneg %p193
      // Predicated region
      $region33: #{tpu_custom_call.1} parent=5 // pred_check
        _
      $region34: #{tpu_custom_call.1} parent=5 // pred_check_branch
        %196 = sbr.rel (%p193) target = $region36
      $region35: #{tpu_custom_call.1} parent=5 // pred_region
        %s197 = ssub.s32 %s13, 1
        %p198 = scmp.lt.s32.totalorder %s18, 1
        %s199 = scalar_select %p198, %s18, 1
        %s200 = smul.addr %s199, 2
        %s201 = smul.addr %s200, 8
        %s202 = scalar_lea.vmem %s0, %s201
        %p203 = pneg %p39
        %p204 = pneg %p36
        %p205 = scmp.lt.s32.totalorder %s18, 1
        %s206 = scalar_select %p205, %s18, 1
        %s207 = smul.addr %s206, 16
        %s208 = smul.addr %s207, 8
        %s209 = scalar_lea.vmem %s1, %s208
        %p210 = pneg %p65
        %p211 = pneg %p62
        %p212 = scmp.lt.s32.totalorder %s18, 1
        %s213 = scalar_select %p212, %s18, 1
        %s214 = scalar_lea.vmem %s2, %s213
        %p215 = pneg %p91
        %p216 = pneg %p88
        %p217 = scmp.lt.s32.totalorder %s18, 1
        %s218 = scalar_select %p217, %s18, 1
        %s219 = smul.addr %s218, 2
        %s220 = scalar_lea.vmem %s3, %s219
        %p221 = pneg %p117
        %p222 = pneg %p114
        %p223 = pneg %p143
        %p224 = pneg %p140
        %s225 = sand.u32 %s130, 1
        %s226 = scalar_lea.sflag [#allocation3], %s225
        %s227 = sand.u32 %s130, 1
        %s228 = smul.addr %s227, 2
        %s229 = scalar_lea.vmem [#allocation2], %s228
        %p230 = scmp.lt.s32.totalorder %s18, 1
        %s231 = scalar_select %p230, %s18, 1
        %s232 = smul.addr %s231, 2
        %s233 = smul.addr %s232, 8
        %s234 = scalar_lea.vmem %s0, %s233
        %p235 = scmp.lt.s32.totalorder %s18, 1
        %s236 = scalar_select %p235, %s18, 1
        %s237 = smul.addr %s236, 16
        %s238 = smul.addr %s237, 8
        %s239 = scalar_lea.vmem %s1, %s238
        %p240 = scmp.lt.s32.totalorder %s18, 1
        %s241 = scalar_select %p240, %s18, 1
        %s242 = scalar_lea.vmem %s2, %s241
        %p243 = scmp.lt.s32.totalorder %s18, 1
        %s244 = scalar_select %p243, %s18, 1
        %s245 = smul.addr %s244, 2
        %s246 = scalar_lea.vmem %s3, %s245
        %v248 = vld [vmem:[%s242] sm:$0x1]
        %v249 = vld [vmem:[%s246] sm:$0x3]
        %v250 = vld [vmem:[%s234] sm:$0xff]
        %v251 = vpack.c.bf16 %v250, %v250
        %v252 = vld [vmem:[%s239] sm:$0xff]
        %v253 = vld [vmem:[%s239 + $0x8] sm:$0xff]
        %v254 = vld [vmem:[%s239 + $0x10] sm:$0xff]
        %v255 = vld [vmem:[%s239 + $0x18] sm:$0xff]
        %v256 = vld [vmem:[%s239 + $0x20] sm:$0xff]
        %v257 = vld [vmem:[%s239 + $0x28] sm:$0xff]
        %v258 = vld [vmem:[%s239 + $0x30] sm:$0xff]
        %v259 = vld [vmem:[%s239 + $0x38] sm:$0xff]
        %v260 = vpack.c.bf16 %v253, %v252
        %v261 = vpack.c.bf16 %v255, %v254
        %v262 = vpack.c.bf16 %v257, %v256
        %v263 = vpack.c.bf16 %v259, %v258
        %vm264 = vcmask 130048
        %v266 = vsel %vm264, %v251, 0
        %v269 = vsel %vm264, %v260, 0
        %v272 = vsel %vm264, %v261, 0
        %v275 = vsel %vm264, %v262, 0
        %v278 = vsel %vm264, %v263, 0
        %280 = vmatprep.subr.bf16.mxu0 0
        %281 = vmatpush1.bf16.xpose.msra.mxu0 %v269
        %282 = vmatprep.subr.bf16.mxu0 0
        %283 = vmatpush1.bf16.xpose.msra.mxu0 %v272
        %284 = vmatprep.subr.bf16.mxu0 0
        %285 = vmatpush1.bf16.xpose.msra.mxu0 %v275
        %286 = vmatprep.subr.bf16.mxu0 0
        %287 = vmatpush1.bf16.xpose.msra.mxu0 %v278
        %288 = vmatprep.subr.bf16.mxu0 0
        %289 = vmatpush1.bf16.xpose.msra.mxu0 0
        %290 = vmatprep.subr.bf16.mxu0 0
        %291 = vmatpush1.bf16.xpose.msra.mxu0 0
        %292 = vmatprep.subr.bf16.mxu0 0
        %293 = vmatpush1.bf16.xpose.msra.mxu0 0
        %294 = vmatprep.subr.bf16.mxu0 0
        %295 = vmatpush1.bf16.xpose.msra.mxu0 0
        %296 = vmatprep.subr.bf16.mxu0 0
        %297 = vmatpush1.bf16.xpose.msra.mxu0 0
        %298 = vmatprep.subr.bf16.mxu0 0
        %299 = vmatpush1.bf16.xpose.msra.mxu0 0
        %300 = vmatprep.subr.bf16.mxu0 0
        %301 = vmatpush1.bf16.xpose.msra.mxu0 0
        %302 = vmatprep.subr.bf16.mxu0 0
        %303 = vmatpush1.bf16.xpose.msra.mxu0 0
        %304 = vmatprep.subr.bf16.mxu0 0
        %305 = vmatpush1.bf16.xpose.msra.mxu0 0
        %306 = vmatprep.subr.bf16.mxu0 0
        %307 = vmatpush1.bf16.xpose.msra.mxu0 0
        %308 = vmatprep.subr.bf16.mxu0 0
        %309 = vmatpush1.bf16.xpose.msra.mxu0 0
        %310 = vmatprep.subr.bf16.mxu0 0
        %311 = vmatpush1.bf16.xpose.msra.mxu0 0
        %312 = vmatprep.mubr.bf16.mxu0 0
        %313 = vmatmul.mubr.bf16.gmra.mrb[0].mxu0 %v266
        %v314 = vpop.f32.mrb[0].mxu0
        %v315 = vadd.f32 0.0, %v314
        %v316 = vpop.f32.mrb[0].mxu0
        %v317 = vpop.f32.mrb[0].mxu0
        %v318 = vpop.f32.mrb[0].mxu0
        %319 = vdwg.mxu0
        %v320 = vmul.f32 %v315, 1.442695
        %v321 = vpow.pop %v320
        %v323 = vlaneseq
        %v324 = vshrl.u32 %v323, 7
        %v325 = vsub.s32 0, %v324
        %v326 = vrot.slane %v248, %v325
        %v328 = vmul.f32 %v321, %v326
        %vm329 = vcmask 523264
        %v330 = vsel %vm329, %v328, 0.0
        %331 = vadd.xlane.f32.xlu0 %v330
        %v332 = vpop.xlane.xlu0 %331
        %v333 = vrcp.pop %v332
        %v334 = vmul.f32 1.0, %v333
        %v335 = vmul.f32 %v328, %v334
        %v336 = vmul.f32 %v335, %v335
        %v337 = vsel %vm329, %v336, 0.0
        %v338 = vrot.slane %v337, 4
        %v339 = vadd.f32 %v337, %v338
        %v340 = vrot.slane %v339, 2
        %v341 = vadd.f32 %v339, %v340
        %v342 = vrot.slane %v341, 1
        %v343 = vadd.f32 %v341, %v342
        %v344 = vmul.f32 %v343, %v249
        %v345 = vrsqrt.pop %v344
        %v346 = vmul.f32 %v344, %v345
        %vm347 = vcmp.eq.f32.partialorder %v344, inf
        %v348 = vsel %vm347, %v344, %v346
        %vm349 = vcmp.eq.f32.partialorder %v344, 0.0
        %v350 = vand.u32 %v344, 2147483648
        %v351 = vsel %vm349, %v350, %v348
        %s352 = scalar_lea.vmem %s234, 8
        %v353 = vld [vmem:[%s352] sm:$0xff]
        %v354 = vpack.c.bf16 %v353, %v353
        %s355 = scalar_lea.vmem %s239, 64
        %v356 = vld [vmem:[%s355] sm:$0xff]
        %v357 = vld [vmem:[%s355 + $0x8] sm:$0xff]
        %v358 = vld [vmem:[%s355 + $0x10] sm:$0xff]
        %v359 = vld [vmem:[%s355 + $0x18] sm:$0xff]
        %v360 = vld [vmem:[%s355 + $0x20] sm:$0xff]
        %v361 = vld [vmem:[%s355 + $0x28] sm:$0xff]
        %v362 = vld [vmem:[%s355 + $0x30] sm:$0xff]
        %v363 = vld [vmem:[%s355 + $0x38] sm:$0xff]
        %v364 = vpack.c.bf16 %v357, %v356
        %v365 = vpack.c.bf16 %v359, %v358
        %v366 = vpack.c.bf16 %v361, %v360
        %v367 = vpack.c.bf16 %v363, %v362
        %v369 = vsel %vm264, %v354, 0
        %v372 = vsel %vm264, %v364, 0
        %v375 = vsel %vm264, %v365, 0
        %v378 = vsel %vm264, %v366, 0
        %v381 = vsel %vm264, %v367, 0
        %383 = vmatprep.subr.bf16.mxu0 0
        %384 = vmatpush1.bf16.xpose.msra.mxu0 %v372
        %385 = vmatprep.subr.bf16.mxu0 0
        %386 = vmatpush1.bf16.xpose.msra.mxu0 %v375
        %387 = vmatprep.subr.bf16.mxu0 0
        %388 = vmatpush1.bf16.xpose.msra.mxu0 %v378
        %389 = vmatprep.subr.bf16.mxu0 0
        %390 = vmatpush1.bf16.xpose.msra.mxu0 %v381
        %391 = vmatprep.subr.bf16.mxu0 0
        %392 = vmatpush1.bf16.xpose.msra.mxu0 0
        %393 = vmatprep.subr.bf16.mxu0 0
        %394 = vmatpush1.bf16.xpose.msra.mxu0 0
        %395 = vmatprep.subr.bf16.mxu0 0
        %396 = vmatpush1.bf16.xpose.msra.mxu0 0
        %397 = vmatprep.subr.bf16.mxu0 0
        %398 = vmatpush1.bf16.xpose.msra.mxu0 0
        %399 = vmatprep.subr.bf16.mxu0 0
        %400 = vmatpush1.bf16.xpose.msra.mxu0 0
        %401 = vmatprep.subr.bf16.mxu0 0
        %402 = vmatpush1.bf16.xpose.msra.mxu0 0
        %403 = vmatprep.subr.bf16.mxu0 0
        %404 = vmatpush1.bf16.xpose.msra.mxu0 0
        %405 = vmatprep.subr.bf16.mxu0 0
        %406 = vmatpush1.bf16.xpose.msra.mxu0 0
        %407 = vmatprep.subr.bf16.mxu0 0
        %408 = vmatpush1.bf16.xpose.msra.mxu0 0
        %409 = vmatprep.subr.bf16.mxu0 0
        %410 = vmatpush1.bf16.xpose.msra.mxu0 0
        %411 = vmatprep.subr.bf16.mxu0 0
        %412 = vmatpush1.bf16.xpose.msra.mxu0 0
        %413 = vmatprep.subr.bf16.mxu0 0
        %414 = vmatpush1.bf16.xpose.msra.mxu0 0
        %415 = vmatprep.mubr.bf16.mxu0 0
        %416 = vmatmul.mubr.bf16.gmra.mrb[0].mxu0 %v369
        %v417 = vpop.f32.mrb[0].mxu0
        %v418 = vadd.f32 0.0, %v417
        %v419 = vpop.f32.mrb[0].mxu0
        %v420 = vpop.f32.mrb[0].mxu0
        %v421 = vpop.f32.mrb[0].mxu0
        %422 = vdwg.mxu0
        %v423 = vmul.f32 %v418, 1.442695
        %v424 = vpow.pop %v423
        %v425 = vmul.f32 %v424, %v326
        %v426 = vsel %vm329, %v425, 0.0
        %427 = vadd.xlane.f32.xlu0 %v426
        %v428 = vpop.xlane.xlu0 %427
        %v429 = vrcp.pop %v428
        %v430 = vmul.f32 1.0, %v429
        %v431 = vmul.f32 %v425, %v430
        %v432 = vmul.f32 %v431, %v431
        %v433 = vsel %vm329, %v432, 0.0
        %v434 = vrot.slane %v433, 4
        %v435 = vadd.f32 %v433, %v434
        %v436 = vrot.slane %v435, 2
        %v437 = vadd.f32 %v435, %v436
        %v438 = vrot.slane %v437, 1
        %v439 = vadd.f32 %v437, %v438
        %v440 = vmul.f32 %v439, %v249
        %v441 = vrsqrt.pop %v440
        %v442 = vmul.f32 %v440, %v441
        %vm443 = vcmp.eq.f32.partialorder %v440, inf
        %v444 = vsel %vm443, %v440, %v442
        %vm445 = vcmp.eq.f32.partialorder %v440, 0.0
        %v446 = vand.u32 %v440, 2147483648
        %v447 = vsel %vm445, %v446, %v444
        %vm448 = vcmask 1040384
        %v449 = vsel %vm448, %v351, %v447
        %vm450 = vcmask 517120
        %451 = vst.msk [vmem:[%s229] sm:$0x3] %vm450, %v449
        %s452 = sand.u32 %s130, 1
        %s453 = scalar_lea.sflag [#allocation3], %s452
        %s454 = sand.u32 %s130, 1
        %s455 = smul.addr %s454, 2
        %s456 = scalar_lea.vmem [#allocation2], %s455
        // Predicated region
        $region37: #{tpu_custom_call.1} parent=35 // pred_check
          %p457 = pneg %p140
        $region38: #{tpu_custom_call.1} parent=35 // pred_check_branch
          %459 = sbr.rel (%p457) target = $region40
        $region39: #{tpu_custom_call.1} parent=35 // pred_region
          %s461 = ssub.s32 32, 32
          %462 = vsyncadd %s453, %s461
          %s463 = smul.addr %s18, 32
          %s464 = scalar_lea.hbm %s4, %s463
          %s466 = sshll.u32 %s456, 4
          %s467 = int_to_ptr.vmem [resolvable:$true] %s466
          %469 = dma.vmem_to_hbm [thread:$0]  %s467, 32, %s464, %s453
        $region40: #{tpu_custom_call.1} parent=35 // pred_fallthru
          _
      $region36: #{tpu_custom_call.1} parent=5 // pred_fallthru
        _
      %p470 = scmp.le.s32.totalorder 2, %s13
      // Predicated region
      $region41: #{tpu_custom_call.1} parent=5 // pred_check
        %p471 = pneg %p470
      $region42: #{tpu_custom_call.1} parent=5 // pred_check_branch
        %473 = sbr.rel (%p471) target = $region44
      $region43: #{tpu_custom_call.1} parent=5 // pred_region
        %s474 = ssub.s32 %s13, 2
        // Predicated region
        $region45: #{tpu_custom_call.1} parent=43 // pred_check
          %p475 = pneg %p146
        $region46: #{tpu_custom_call.1} parent=43 // pred_check_branch
          %477 = sbr.rel (%p475) target = $region48
        $region47: #{tpu_custom_call.1} parent=43 // pred_region
          %s478 = sand.u32 %s131, 1
          %s479 = scalar_lea.sflag [#allocation3], %s478
          %s480 = sand.u32 %s131, 1
          %s481 = smul.addr %s480, 2
          %s482 = scalar_lea.vmem [#allocation2], %s481
          %483 = dma.done %s479, 32
        $region48: #{tpu_custom_call.1} parent=43 // pred_fallthru
          _
      $region44: #{tpu_custom_call.1} parent=5 // pred_fallthru
        _
    $region6: #{tpu_custom_call.1} parent=1 // loop_footer
      %s17 = sadd.s32 1, %s13
    $region7: #{tpu_custom_call.1} parent=1 // loop_footer_branch
      %12 = sbr.rel target = $region3
    $region8: #{tpu_custom_call.1} parent=1 // loop_exit
      _
    %484 = vsyncpa [#allocation3], 1
    %s485 = scalar_lea.sflag [#allocation3], 1
    %486 = vsyncpa %s485, 1

</llo_original>
